<compile_context>
chip_gen: v5e
topology: v5e:2x2
jax: 0.10.0
libtpu: 0.0.40
codegen_flags: <defaults>
</compile_context>

<pallas_src>
import jax
import jax.numpy as jnp
from jax.experimental import pallas as pl
from jax.experimental.pallas import tpu as pltpu


# ----------------------------------------------------------------------------
# Kernel: one batch element per grid step, all 3 layers fused.
# ----------------------------------------------------------------------------
def _segnet_down3_kernel(x_ref,
                         s1_ref, bw1_ref, sc1_ref, sh1_ref,
                         s2_ref, bw2_ref, sc2_ref, sh2_ref,
                         s3_ref, bw3_ref, sc3_ref, sh3_ref,
                         o_ref):
    # x_ref:  (1, H, W*Cin)      activation, lane index = w*Cin + c
    # s*_ref: (3, Hout, Hin)     H-tap row-selection matrices (encode H pad)
    # bw*_ref:(3, Win*Cin, Wout*Cout)  banded W-conv weights (encode W pad)
    # sc/sh:  (1, Wout*Cout)     folded BN scale / shift, tiled over Wout
    y = x_ref[0].astype(jnp.float32)                       # (H, W*Cin)

    layers = ((s1_ref, bw1_ref, sc1_ref, sh1_ref),
              (s2_ref, bw2_ref, sc2_ref, sh2_ref),
              (s3_ref, bw3_ref, sc3_ref, sh3_ref))

    for s_ref, bw_ref, sc_ref, sh_ref in layers:
        _, h_out, _ = s_ref.shape
        _, _, n_out = bw_ref.shape
        acc = jnp.zeros((h_out, n_out), jnp.float32)
        for kh in range(3):
            # select input rows 2*ho + kh - 1 (zero rows for out-of-range)
            rows = jnp.dot(s_ref[kh], y, preferred_element_type=jnp.float32)
            # banded matmul = conv along W for this H tap (K = Win*Cin)
            acc = acc + jnp.dot(rows, bw_ref[kh],
                                preferred_element_type=jnp.float32)
        # folded BatchNorm (eval) + ReLU
        y = jnp.maximum(acc * sc_ref[...] + sh_ref[...], 0.0)

    o_ref[0] = y.astype(o_ref.dtype)                       # (Ho3, Wo3*Cout)


# ----------------------------------------------------------------------------
# Wrapper-side constant construction (pure JAX, outside the kernel).
# ----------------------------------------------------------------------------
def _make_row_select(h_in):
    """S[kh][ho, hi] = 1 iff hi == 2*ho + kh - 1 (zero-pad rows drop out)."""
    h_out = (h_in - 1) // 2 + 1
    ho = jnp.arange(h_out)[:, None]
    hi = jnp.arange(h_in)[None, :]
    mats = [(hi == 2 * ho + kh - 1).astype(jnp.float32) for kh in range(3)]
    return jnp.stack(mats)                                 # (3, h_out, h_in)


def _make_banded_w(w_hwio, w_in):
    """BW[kh][win*Cin+ci, wout*Cout+co] = W[kh, win-2*wout+1, ci, co] (else 0)."""
    _, _, cin, cout = w_hwio.shape
    w_out = (w_in - 1) // 2 + 1
    win = jnp.arange(w_in)[:, None]                        # (w_in, 1)
    wout = jnp.arange(w_out)[None, :]                      # (1, w_out)
    kw = win - 2 * wout + 1                                # (w_in, w_out)
    valid = (kw >= 0) & (kw < 3)
    kw_c = jnp.clip(kw, 0, 2)
    w_g = w_hwio[:, kw_c]                                  # (3, w_in, w_out, cin, cout)
    w_g = jnp.where(valid[None, :, :, None, None], w_g, 0.0)
    w_g = jnp.transpose(w_g, (0, 1, 3, 2, 4))              # (3, w_in, cin, w_out, cout)
    return w_g.reshape(3, w_in * cin, w_out * cout)


def segnet_down3(x_nchw, params, eps=1e-5):
    """segnetDown3.forward — input/output NCHW to match the PyTorch module."""
    n, c1, h, w = x_nchw.shape
    # NCHW -> NHWC -> (N, H, W*C): W and C folded onto the lane axis.
    x2d = jnp.transpose(x_nchw, (0, 2, 3, 1)).reshape(n, h, w * c1)

    args = [x2d]
    in_specs = [pl.BlockSpec((1, h, w * c1), lambda i: (i, 0, 0))]

    h_in, w_in, c_in = h, w, c1
    for p in params:
        cout = p["w"].shape[-1]
        h_out = (h_in - 1) // 2 + 1
        w_out = (w_in - 1) // 2 + 1

        s_mat = _make_row_select(h_in)                     # (3, h_out, h_in)
        bw = _make_banded_w(p["w"], w_in)                  # (3, w_in*c_in, w_out*cout)
        scale = p["gamma"] / jnp.sqrt(p["var"] + eps)
        shift = (p["b"] - p["mean"]) * scale + p["beta"]
        sc_t = jnp.tile(scale, w_out).reshape(1, w_out * cout).astype(jnp.float32)
        sh_t = jnp.tile(shift, w_out).reshape(1, w_out * cout).astype(jnp.float32)

        for a in (s_mat, bw, sc_t, sh_t):
            args.append(a)
            in_specs.append(
                pl.BlockSpec(a.shape, lambda i, nd=a.ndim: (0,) * nd))

        h_in, w_in, c_in = h_out, w_out, cout

    out2d = pl.pallas_call(
        _segnet_down3_kernel,
        out_shape=jax.ShapeDtypeStruct((n, h_in, w_in * c_in), x_nchw.dtype),
        grid=(n,),
        in_specs=in_specs,
        out_specs=pl.BlockSpec((1, h_in, w_in * c_in), lambda i: (i, 0, 0)),
        compiler_params=pltpu.CompilerParams(dimension_semantics=("parallel",)),
    )(*args)

    # (N, Ho, Wo*C) -> NHWC -> NCHW
    return jnp.transpose(out2d.reshape(n, h_in, w_in, c_in), (0, 3, 1, 2))


# ----------------------------------------------------------------------------
# Params / reference / test
# ----------------------------------------------------------------------------
def init_cbr_params(key, cin, cout):
    kw_, kb_, kg_, kbe_, km_, kv_ = jax.random.split(key, 6)
    fan_in = cin * 3 * 3
    bound = 1.0 / jnp.sqrt(fan_in)
    return dict(
        w=jax.random.uniform(kw_, (3, 3, cin, cout), jnp.float32, -bound, bound),  # HWIO
        b=jax.random.uniform(kb_, (cout,), jnp.float32, -bound, bound),
        gamma=jax.random.uniform(kg_, (cout,), jnp.float32, 0.5, 1.5),
        beta=jax.random.normal(kbe_, (cout,), jnp.float32) * 0.1,
        mean=jax.random.normal(km_, (cout,), jnp.float32) * 0.1,
        var=jax.random.uniform(kv_, (cout,), jnp.float32, 0.5, 1.5),
    )


def _reference(x_nchw, params, eps=1e-5):
    """Pure-JAX reference (lax conv + eval-mode BN + ReLU)."""
    x = jnp.transpose(x_nchw, (0, 2, 3, 1))
    for p in params:
        y = jax.lax.conv_general_dilated(
            x, p["w"], window_strides=(2, 2), padding=((1, 1), (1, 1)),
            dimension_numbers=("NHWC", "HWIO", "NHWC"))
        y = y + p["b"]
        y = (y - p["mean"]) / jnp.sqrt(p["var"] + eps) * p["gamma"] + p["beta"]
        x = jnp.maximum(y, 0.0)
    return jnp.transpose(x, (0, 3, 1, 2))


if __name__ == "__main__":
    key = jax.random.PRNGKey(0)
    kx, k1, k2, k3 = jax.random.split(key, 4)

    in_size, out_size = 4, 8
    x = jax.random.normal(kx, (2, in_size, 16, 16), jnp.float32)   # NCHW

    params = [
        init_cbr_params(k1, in_size, out_size),
        init_cbr_params(k2, out_size, out_size),
        init_cbr_params(k3, out_size, out_size),
    ]

    out = jax.block_until_ready(segnet_down3(x, params))
    ref = jax.block_until_ready(_reference(x, params))

    assert out.shape == (2, out_size, 2, 2), out.shape
    max_err = float(jnp.max(jnp.abs(out - ref)))
    assert max_err < 2e-3, max_err
    print("KERNEL_OK")
</pallas_src>

<mosaic_0001>
module attributes {stable_mosaic.version = 11 : i64} {
  func.func @_segnet_down3_kernel(%arg0: i32, %arg1: memref<1x16x64xf32, #tpu.memory_space<vmem>>, %arg2: memref<3x8x16xf32, #tpu.memory_space<vmem>>, %arg3: memref<3x64x64xf32, #tpu.memory_space<vmem>>, %arg4: memref<1x64xf32, #tpu.memory_space<vmem>>, %arg5: memref<1x64xf32, #tpu.memory_space<vmem>>, %arg6: memref<3x4x8xf32, #tpu.memory_space<vmem>>, %arg7: memref<3x64x32xf32, #tpu.memory_space<vmem>>, %arg8: memref<1x32xf32, #tpu.memory_space<vmem>>, %arg9: memref<1x32xf32, #tpu.memory_space<vmem>>, %arg10: memref<3x2x4xf32, #tpu.memory_space<vmem>>, %arg11: memref<3x32x16xf32, #tpu.memory_space<vmem>>, %arg12: memref<1x16xf32, #tpu.memory_space<vmem>>, %arg13: memref<1x16xf32, #tpu.memory_space<vmem>>, %arg14: memref<1x2x16xf32, #tpu.memory_space<vmem>>) attributes {dimension_semantics = [#tpu.dimension_semantics<parallel>], iteration_bounds = array<i64: 2>, scalar_prefetch = 0 : i64, scratch_operands = 0 : i64, tpu.core_type = #tpu.core_type<tc>, window_params = [{transform_indices = @transform_0, window_bounds = array<i64: 1, 16, 64>}, {pipeline_mode = #tpu.pipeline_mode<synchronous>, transform_indices = @transform_1, window_bounds = array<i64: 3, 8, 16>}, {pipeline_mode = #tpu.pipeline_mode<synchronous>, transform_indices = @transform_2, window_bounds = array<i64: 3, 64, 64>}, {pipeline_mode = #tpu.pipeline_mode<synchronous>, transform_indices = @transform_3, window_bounds = array<i64: 1, 64>}, {pipeline_mode = #tpu.pipeline_mode<synchronous>, transform_indices = @transform_4, window_bounds = array<i64: 1, 64>}, {pipeline_mode = #tpu.pipeline_mode<synchronous>, transform_indices = @transform_5, window_bounds = array<i64: 3, 4, 8>}, {pipeline_mode = #tpu.pipeline_mode<synchronous>, transform_indices = @transform_6, window_bounds = array<i64: 3, 64, 32>}, {pipeline_mode = #tpu.pipeline_mode<synchronous>, transform_indices = @transform_7, window_bounds = array<i64: 1, 32>}, {pipeline_mode = #tpu.pipeline_mode<synchronous>, transform_indices = @transform_8, window_bounds = array<i64: 1, 32>}, {pipeline_mode = #tpu.pipeline_mode<synchronous>, transform_indices = @transform_9, window_bounds = array<i64: 3, 2, 4>}, {pipeline_mode = #tpu.pipeline_mode<synchronous>, transform_indices = @transform_10, window_bounds = array<i64: 3, 32, 16>}, {pipeline_mode = #tpu.pipeline_mode<synchronous>, transform_indices = @transform_11, window_bounds = array<i64: 1, 16>}, {pipeline_mode = #tpu.pipeline_mode<synchronous>, transform_indices = @transform_12, window_bounds = array<i64: 1, 16>}, {transform_indices = @transform_13, window_bounds = array<i64: 1, 2, 16>}]} {
    %c0 = arith.constant 0 : index
    %c0_0 = arith.constant 0 : index
    %c0_1 = arith.constant 0 : index
    %0 = vector.load %arg1[%c0, %c0_0, %c0_1] : memref<1x16x64xf32, #tpu.memory_space<vmem>>, vector<1x16x64xf32>
    %1 = vector.shape_cast %0 : vector<1x16x64xf32> to vector<16x64xf32>
    %cst = arith.constant 0.000000e+00 : f32
    %2 = vector.broadcast %cst : f32 to vector<8x64xf32>
    %c0_2 = arith.constant 0 : index
    %c0_3 = arith.constant 0 : index
    %c0_4 = arith.constant 0 : index
    %3 = vector.load %arg2[%c0_2, %c0_3, %c0_4] : memref<3x8x16xf32, #tpu.memory_space<vmem>>, vector<1x8x16xf32>
    %4 = vector.shape_cast %3 : vector<1x8x16xf32> to vector<8x16xf32>
    %cst_5 = arith.constant dense<0.000000e+00> : vector<8x64xf32>
    %5 = tpu.matmul %4, %1, %cst_5 {dimension_numbers = #tpu.dot_dimension_numbers<[1], [0], [0], [1], [0, 0, 1, 1], [], []>} : vector<8x16xf32>, vector<16x64xf32>, vector<8x64xf32> -> vector<8x64xf32>
    %c0_6 = arith.constant 0 : index
    %c0_7 = arith.constant 0 : index
    %c0_8 = arith.constant 0 : index
    %6 = vector.load %arg3[%c0_6, %c0_7, %c0_8] : memref<3x64x64xf32, #tpu.memory_space<vmem>>, vector<1x64x64xf32>
    %7 = vector.shape_cast %6 : vector<1x64x64xf32> to vector<64x64xf32>
    %cst_9 = arith.constant dense<0.000000e+00> : vector<8x64xf32>
    %8 = tpu.matmul %5, %7, %cst_9 {dimension_numbers = #tpu.dot_dimension_numbers<[1], [0], [0], [1], [0, 0, 1, 1], [], []>} : vector<8x64xf32>, vector<64x64xf32>, vector<8x64xf32> -> vector<8x64xf32>
    %9 = arith.addf %2, %8 : vector<8x64xf32>
    %c1 = arith.constant 1 : index
    %c0_10 = arith.constant 0 : index
    %c0_11 = arith.constant 0 : index
    %10 = vector.load %arg2[%c1, %c0_10, %c0_11] : memref<3x8x16xf32, #tpu.memory_space<vmem>>, vector<1x8x16xf32>
    %11 = vector.shape_cast %10 : vector<1x8x16xf32> to vector<8x16xf32>
    %cst_12 = arith.constant dense<0.000000e+00> : vector<8x64xf32>
    %12 = tpu.matmul %11, %1, %cst_12 {dimension_numbers = #tpu.dot_dimension_numbers<[1], [0], [0], [1], [0, 0, 1, 1], [], []>} : vector<8x16xf32>, vector<16x64xf32>, vector<8x64xf32> -> vector<8x64xf32>
    %c1_13 = arith.constant 1 : index
    %c0_14 = arith.constant 0 : index
    %c0_15 = arith.constant 0 : index
    %13 = vector.load %arg3[%c1_13, %c0_14, %c0_15] : memref<3x64x64xf32, #tpu.memory_space<vmem>>, vector<1x64x64xf32>
    %14 = vector.shape_cast %13 : vector<1x64x64xf32> to vector<64x64xf32>
    %cst_16 = arith.constant dense<0.000000e+00> : vector<8x64xf32>
    %15 = tpu.matmul %12, %14, %cst_16 {dimension_numbers = #tpu.dot_dimension_numbers<[1], [0], [0], [1], [0, 0, 1, 1], [], []>} : vector<8x64xf32>, vector<64x64xf32>, vector<8x64xf32> -> vector<8x64xf32>
    %16 = arith.addf %9, %15 : vector<8x64xf32>
    %c2 = arith.constant 2 : index
    %c0_17 = arith.constant 0 : index
    %c0_18 = arith.constant 0 : index
    %17 = vector.load %arg2[%c2, %c0_17, %c0_18] : memref<3x8x16xf32, #tpu.memory_space<vmem>>, vector<1x8x16xf32>
    %18 = vector.shape_cast %17 : vector<1x8x16xf32> to vector<8x16xf32>
    %cst_19 = arith.constant dense<0.000000e+00> : vector<8x64xf32>
    %19 = tpu.matmul %18, %1, %cst_19 {dimension_numbers = #tpu.dot_dimension_numbers<[1], [0], [0], [1], [0, 0, 1, 1], [], []>} : vector<8x16xf32>, vector<16x64xf32>, vector<8x64xf32> -> vector<8x64xf32>
    %c2_20 = arith.constant 2 : index
    %c0_21 = arith.constant 0 : index
    %c0_22 = arith.constant 0 : index
    %20 = vector.load %arg3[%c2_20, %c0_21, %c0_22] : memref<3x64x64xf32, #tpu.memory_space<vmem>>, vector<1x64x64xf32>
    %21 = vector.shape_cast %20 : vector<1x64x64xf32> to vector<64x64xf32>
    %cst_23 = arith.constant dense<0.000000e+00> : vector<8x64xf32>
    %22 = tpu.matmul %19, %21, %cst_23 {dimension_numbers = #tpu.dot_dimension_numbers<[1], [0], [0], [1], [0, 0, 1, 1], [], []>} : vector<8x64xf32>, vector<64x64xf32>, vector<8x64xf32> -> vector<8x64xf32>
    %23 = arith.addf %16, %22 : vector<8x64xf32>
    %c0_24 = arith.constant 0 : index
    %c0_25 = arith.constant 0 : index
    %24 = vector.load %arg4[%c0_24, %c0_25] : memref<1x64xf32, #tpu.memory_space<vmem>>, vector<1x64xf32>
    %25 = vector.broadcast %24 : vector<1x64xf32> to vector<8x64xf32>
    %26 = arith.mulf %23, %25 : vector<8x64xf32>
    %c0_26 = arith.constant 0 : index
    %c0_27 = arith.constant 0 : index
    %27 = vector.load %arg5[%c0_26, %c0_27] : memref<1x64xf32, #tpu.memory_space<vmem>>, vector<1x64xf32>
    %28 = vector.broadcast %27 : vector<1x64xf32> to vector<8x64xf32>
    %29 = arith.addf %26, %28 : vector<8x64xf32>
    %cst_28 = arith.constant 0.000000e+00 : f32
    %30 = vector.broadcast %cst_28 : f32 to vector<8x64xf32>
    %31 = arith.maximumf %29, %30 : vector<8x64xf32>
    %cst_29 = arith.constant 0.000000e+00 : f32
    %32 = vector.broadcast %cst_29 : f32 to vector<4x32xf32>
    %c0_30 = arith.constant 0 : index
    %c0_31 = arith.constant 0 : index
    %c0_32 = arith.constant 0 : index
    %33 = vector.load %arg6[%c0_30, %c0_31, %c0_32] : memref<3x4x8xf32, #tpu.memory_space<vmem>>, vector<1x4x8xf32>
    %34 = vector.shape_cast %33 : vector<1x4x8xf32> to vector<4x8xf32>
    %cst_33 = arith.constant dense<0.000000e+00> : vector<4x64xf32>
    %35 = tpu.matmul %34, %31, %cst_33 {dimension_numbers = #tpu.dot_dimension_numbers<[1], [0], [0], [1], [0, 0, 1, 1], [], []>} : vector<4x8xf32>, vector<8x64xf32>, vector<4x64xf32> -> vector<4x64xf32>
    %c0_34 = arith.constant 0 : index
    %c0_35 = arith.constant 0 : index
    %c0_36 = arith.constant 0 : index
    %36 = vector.load %arg7[%c0_34, %c0_35, %c0_36] : memref<3x64x32xf32, #tpu.memory_space<vmem>>, vector<1x64x32xf32>
    %37 = vector.shape_cast %36 : vector<1x64x32xf32> to vector<64x32xf32>
    %cst_37 = arith.constant dense<0.000000e+00> : vector<4x32xf32>
    %38 = tpu.matmul %35, %37, %cst_37 {dimension_numbers = #tpu.dot_dimension_numbers<[1], [0], [0], [1], [0, 0, 1, 1], [], []>} : vector<4x64xf32>, vector<64x32xf32>, vector<4x32xf32> -> vector<4x32xf32>
    %39 = arith.addf %32, %38 : vector<4x32xf32>
    %c1_38 = arith.constant 1 : index
    %c0_39 = arith.constant 0 : index
    %c0_40 = arith.constant 0 : index
    %40 = vector.load %arg6[%c1_38, %c0_39, %c0_40] : memref<3x4x8xf32, #tpu.memory_space<vmem>>, vector<1x4x8xf32>
    %41 = vector.shape_cast %40 : vector<1x4x8xf32> to vector<4x8xf32>
    %cst_41 = arith.constant dense<0.000000e+00> : vector<4x64xf32>
    %42 = tpu.matmul %41, %31, %cst_41 {dimension_numbers = #tpu.dot_dimension_numbers<[1], [0], [0], [1], [0, 0, 1, 1], [], []>} : vector<4x8xf32>, vector<8x64xf32>, vector<4x64xf32> -> vector<4x64xf32>
    %c1_42 = arith.constant 1 : index
    %c0_43 = arith.constant 0 : index
    %c0_44 = arith.constant 0 : index
    %43 = vector.load %arg7[%c1_42, %c0_43, %c0_44] : memref<3x64x32xf32, #tpu.memory_space<vmem>>, vector<1x64x32xf32>
    %44 = vector.shape_cast %43 : vector<1x64x32xf32> to vector<64x32xf32>
    %cst_45 = arith.constant dense<0.000000e+00> : vector<4x32xf32>
    %45 = tpu.matmul %42, %44, %cst_45 {dimension_numbers = #tpu.dot_dimension_numbers<[1], [0], [0], [1], [0, 0, 1, 1], [], []>} : vector<4x64xf32>, vector<64x32xf32>, vector<4x32xf32> -> vector<4x32xf32>
    %46 = arith.addf %39, %45 : vector<4x32xf32>
    %c2_46 = arith.constant 2 : index
    %c0_47 = arith.constant 0 : index
    %c0_48 = arith.constant 0 : index
    %47 = vector.load %arg6[%c2_46, %c0_47, %c0_48] : memref<3x4x8xf32, #tpu.memory_space<vmem>>, vector<1x4x8xf32>
    %48 = vector.shape_cast %47 : vector<1x4x8xf32> to vector<4x8xf32>
    %cst_49 = arith.constant dense<0.000000e+00> : vector<4x64xf32>
    %49 = tpu.matmul %48, %31, %cst_49 {dimension_numbers = #tpu.dot_dimension_numbers<[1], [0], [0], [1], [0, 0, 1, 1], [], []>} : vector<4x8xf32>, vector<8x64xf32>, vector<4x64xf32> -> vector<4x64xf32>
    %c2_50 = arith.constant 2 : index
    %c0_51 = arith.constant 0 : index
    %c0_52 = arith.constant 0 : index
    %50 = vector.load %arg7[%c2_50, %c0_51, %c0_52] : memref<3x64x32xf32, #tpu.memory_space<vmem>>, vector<1x64x32xf32>
    %51 = vector.shape_cast %50 : vector<1x64x32xf32> to vector<64x32xf32>
    %cst_53 = arith.constant dense<0.000000e+00> : vector<4x32xf32>
    %52 = tpu.matmul %49, %51, %cst_53 {dimension_numbers = #tpu.dot_dimension_numbers<[1], [0], [0], [1], [0, 0, 1, 1], [], []>} : vector<4x64xf32>, vector<64x32xf32>, vector<4x32xf32> -> vector<4x32xf32>
    %53 = arith.addf %46, %52 : vector<4x32xf32>
    %c0_54 = arith.constant 0 : index
    %c0_55 = arith.constant 0 : index
    %54 = vector.load %arg8[%c0_54, %c0_55] : memref<1x32xf32, #tpu.memory_space<vmem>>, vector<1x32xf32>
    %55 = vector.broadcast %54 : vector<1x32xf32> to vector<4x32xf32>
    %56 = arith.mulf %53, %55 : vector<4x32xf32>
    %c0_56 = arith.constant 0 : index
    %c0_57 = arith.constant 0 : index
    %57 = vector.load %arg9[%c0_56, %c0_57] : memref<1x32xf32, #tpu.memory_space<vmem>>, vector<1x32xf32>
    %58 = vector.broadcast %57 : vector<1x32xf32> to vector<4x32xf32>
    %59 = arith.addf %56, %58 : vector<4x32xf32>
    %cst_58 = arith.constant 0.000000e+00 : f32
    %60 = vector.broadcast %cst_58 : f32 to vector<4x32xf32>
    %61 = arith.maximumf %59, %60 : vector<4x32xf32>
    %cst_59 = arith.constant 0.000000e+00 : f32
    %62 = vector.broadcast %cst_59 : f32 to vector<2x16xf32>
    %c0_60 = arith.constant 0 : index
    %c0_61 = arith.constant 0 : index
    %c0_62 = arith.constant 0 : index
    %63 = vector.load %arg10[%c0_60, %c0_61, %c0_62] : memref<3x2x4xf32, #tpu.memory_space<vmem>>, vector<1x2x4xf32>
    %64 = vector.shape_cast %63 : vector<1x2x4xf32> to vector<2x4xf32>
    %cst_63 = arith.constant dense<0.000000e+00> : vector<2x32xf32>
    %65 = tpu.matmul %64, %61, %cst_63 {dimension_numbers = #tpu.dot_dimension_numbers<[1], [0], [0], [1], [0, 0, 1, 1], [], []>} : vector<2x4xf32>, vector<4x32xf32>, vector<2x32xf32> -> vector<2x32xf32>
    %c0_64 = arith.constant 0 : index
    %c0_65 = arith.constant 0 : index
    %c0_66 = arith.constant 0 : index
    %66 = vector.load %arg11[%c0_64, %c0_65, %c0_66] : memref<3x32x16xf32, #tpu.memory_space<vmem>>, vector<1x32x16xf32>
    %67 = vector.shape_cast %66 : vector<1x32x16xf32> to vector<32x16xf32>
    %cst_67 = arith.constant dense<0.000000e+00> : vector<2x16xf32>
    %68 = tpu.matmul %65, %67, %cst_67 {dimension_numbers = #tpu.dot_dimension_numbers<[1], [0], [0], [1], [0, 0, 1, 1], [], []>} : vector<2x32xf32>, vector<32x16xf32>, vector<2x16xf32> -> vector<2x16xf32>
    %69 = arith.addf %62, %68 : vector<2x16xf32>
    %c1_68 = arith.constant 1 : index
    %c0_69 = arith.constant 0 : index
    %c0_70 = arith.constant 0 : index
    %70 = vector.load %arg10[%c1_68, %c0_69, %c0_70] : memref<3x2x4xf32, #tpu.memory_space<vmem>>, vector<1x2x4xf32>
    %71 = vector.shape_cast %70 : vector<1x2x4xf32> to vector<2x4xf32>
    %cst_71 = arith.constant dense<0.000000e+00> : vector<2x32xf32>
    %72 = tpu.matmul %71, %61, %cst_71 {dimension_numbers = #tpu.dot_dimension_numbers<[1], [0], [0], [1], [0, 0, 1, 1], [], []>} : vector<2x4xf32>, vector<4x32xf32>, vector<2x32xf32> -> vector<2x32xf32>
    %c1_72 = arith.constant 1 : index
    %c0_73 = arith.constant 0 : index
    %c0_74 = arith.constant 0 : index
    %73 = vector.load %arg11[%c1_72, %c0_73, %c0_74] : memref<3x32x16xf32, #tpu.memory_space<vmem>>, vector<1x32x16xf32>
    %74 = vector.shape_cast %73 : vector<1x32x16xf32> to vector<32x16xf32>
    %cst_75 = arith.constant dense<0.000000e+00> : vector<2x16xf32>
    %75 = tpu.matmul %72, %74, %cst_75 {dimension_numbers = #tpu.dot_dimension_numbers<[1], [0], [0], [1], [0, 0, 1, 1], [], []>} : vector<2x32xf32>, vector<32x16xf32>, vector<2x16xf32> -> vector<2x16xf32>
    %76 = arith.addf %69, %75 : vector<2x16xf32>
    %c2_76 = arith.constant 2 : index
    %c0_77 = arith.constant 0 : index
    %c0_78 = arith.constant 0 : index
    %77 = vector.load %arg10[%c2_76, %c0_77, %c0_78] : memref<3x2x4xf32, #tpu.memory_space<vmem>>, vector<1x2x4xf32>
    %78 = vector.shape_cast %77 : vector<1x2x4xf32> to vector<2x4xf32>
    %cst_79 = arith.constant dense<0.000000e+00> : vector<2x32xf32>
    %79 = tpu.matmul %78, %61, %cst_79 {dimension_numbers = #tpu.dot_dimension_numbers<[1], [0], [0], [1], [0, 0, 1, 1], [], []>} : vector<2x4xf32>, vector<4x32xf32>, vector<2x32xf32> -> vector<2x32xf32>
    %c2_80 = arith.constant 2 : index
    %c0_81 = arith.constant 0 : index
    %c0_82 = arith.constant 0 : index
    %80 = vector.load %arg11[%c2_80, %c0_81, %c0_82] : memref<3x32x16xf32, #tpu.memory_space<vmem>>, vector<1x32x16xf32>
    %81 = vector.shape_cast %80 : vector<1x32x16xf32> to vector<32x16xf32>
    %cst_83 = arith.constant dense<0.000000e+00> : vector<2x16xf32>
    %82 = tpu.matmul %79, %81, %cst_83 {dimension_numbers = #tpu.dot_dimension_numbers<[1], [0], [0], [1], [0, 0, 1, 1], [], []>} : vector<2x32xf32>, vector<32x16xf32>, vector<2x16xf32> -> vector<2x16xf32>
    %83 = arith.addf %76, %82 : vector<2x16xf32>
    %c0_84 = arith.constant 0 : index
    %c0_85 = arith.constant 0 : index
    %84 = vector.load %arg12[%c0_84, %c0_85] : memref<1x16xf32, #tpu.memory_space<vmem>>, vector<1x16xf32>
    %85 = vector.broadcast %84 : vector<1x16xf32> to vector<2x16xf32>
    %86 = arith.mulf %83, %85 : vector<2x16xf32>
    %c0_86 = arith.constant 0 : index
    %c0_87 = arith.constant 0 : index
    %87 = vector.load %arg13[%c0_86, %c0_87] : memref<1x16xf32, #tpu.memory_space<vmem>>, vector<1x16xf32>
    %88 = vector.broadcast %87 : vector<1x16xf32> to vector<2x16xf32>
    %89 = arith.addf %86, %88 : vector<2x16xf32>
    %cst_88 = arith.constant 0.000000e+00 : f32
    %90 = vector.broadcast %cst_88 : f32 to vector<2x16xf32>
    %91 = arith.maximumf %89, %90 : vector<2x16xf32>
    %c0_89 = arith.constant 0 : index
    %c0_90 = arith.constant 0 : index
    %c0_91 = arith.constant 0 : index
    %92 = vector.load %arg14[%c0_89, %c0_90, %c0_91] : memref<1x2x16xf32, #tpu.memory_space<vmem>>, vector<1x2x16xf32>
    %93 = vector.shape_cast %92 : vector<1x2x16xf32> to vector<2x16xf32>
    %94 = vector.shape_cast %91 : vector<2x16xf32> to vector<1x2x16xf32>
    tpu.vector_store %arg14[%c0_89, %c0_90, %c0_91], %94 {strides = array<i32>} : memref<1x2x16xf32, #tpu.memory_space<vmem>>, vector<1x2x16xf32>,
    return
  }
  func.func @transform_0(%arg0: i32) -> (i32, i32, i32) {
    %c0_i32 = arith.constant 0 : i32
    %c0_i32_0 = arith.constant 0 : i32
    %c0_i32_1 = arith.constant 0 : i32
    return %arg0, %c0_i32, %c0_i32_0 : i32, i32, i32
  }
  func.func @transform_1(%arg0: i32) -> (i32, i32, i32) {
    %c0_i32 = arith.constant 0 : i32
    %c0_i32_0 = arith.constant 0 : i32
    %c0_i32_1 = arith.constant 0 : i32
    %c0_i32_2 = arith.constant 0 : i32
    return %c0_i32, %c0_i32_0, %c0_i32_1 : i32, i32, i32
  }
  func.func @transform_2(%arg0: i32) -> (i32, i32, i32) {
    %c0_i32 = arith.constant 0 : i32
    %c0_i32_0 = arith.constant 0 : i32
    %c0_i32_1 = arith.constant 0 : i32
    %c0_i32_2 = arith.constant 0 : i32
    return %c0_i32, %c0_i32_0, %c0_i32_1 : i32, i32, i32
  }
  func.func @transform_3(%arg0: i32) -> (i32, i32) {
    %c0_i32 = arith.constant 0 : i32
    %c0_i32_0 = arith.constant 0 : i32
    %c0_i32_1 = arith.constant 0 : i32
    return %c0_i32, %c0_i32_0 : i32, i32
  }
  func.func @transform_4(%arg0: i32) -> (i32, i32) {
    %c0_i32 = arith.constant 0 : i32
    %c0_i32_0 = arith.constant 0 : i32
    %c0_i32_1 = arith.constant 0 : i32
    return %c0_i32, %c0_i32_0 : i32, i32
  }
  func.func @transform_5(%arg0: i32) -> (i32, i32, i32) {
    %c0_i32 = arith.constant 0 : i32
    %c0_i32_0 = arith.constant 0 : i32
    %c0_i32_1 = arith.constant 0 : i32
    %c0_i32_2 = arith.constant 0 : i32
    return %c0_i32, %c0_i32_0, %c0_i32_1 : i32, i32, i32
  }
  func.func @transform_6(%arg0: i32) -> (i32, i32, i32) {
    %c0_i32 = arith.constant 0 : i32
    %c0_i32_0 = arith.constant 0 : i32
    %c0_i32_1 = arith.constant 0 : i32
    %c0_i32_2 = arith.constant 0 : i32
    return %c0_i32, %c0_i32_0, %c0_i32_1 : i32, i32, i32
  }
  func.func @transform_7(%arg0: i32) -> (i32, i32) {
    %c0_i32 = arith.constant 0 : i32
    %c0_i32_0 = arith.constant 0 : i32
    %c0_i32_1 = arith.constant 0 : i32
    return %c0_i32, %c0_i32_0 : i32, i32
  }
  func.func @transform_8(%arg0: i32) -> (i32, i32) {
    %c0_i32 = arith.constant 0 : i32
    %c0_i32_0 = arith.constant 0 : i32
    %c0_i32_1 = arith.constant 0 : i32
    return %c0_i32, %c0_i32_0 : i32, i32
  }
  func.func @transform_9(%arg0: i32) -> (i32, i32, i32) {
    %c0_i32 = arith.constant 0 : i32
    %c0_i32_0 = arith.constant 0 : i32
    %c0_i32_1 = arith.constant 0 : i32
    %c0_i32_2 = arith.constant 0 : i32
    return %c0_i32, %c0_i32_0, %c0_i32_1 : i32, i32, i32
  }
  func.func @transform_10(%arg0: i32) -> (i32, i32, i32) {
    %c0_i32 = arith.constant 0 : i32
    %c0_i32_0 = arith.constant 0 : i32
    %c0_i32_1 = arith.constant 0 : i32
    %c0_i32_2 = arith.constant 0 : i32
    return %c0_i32, %c0_i32_0, %c0_i32_1 : i32, i32, i32
  }
  func.func @transform_11(%arg0: i32) -> (i32, i32) {
    %c0_i32 = arith.constant 0 : i32
    %c0_i32_0 = arith.constant 0 : i32
    %c0_i32_1 = arith.constant 0 : i32
    return %c0_i32, %c0_i32_0 : i32, i32
  }
  func.func @transform_12(%arg0: i32) -> (i32, i32) {
    %c0_i32 = arith.constant 0 : i32
    %c0_i32_0 = arith.constant 0 : i32
    %c0_i32_1 = arith.constant 0 : i32
    return %c0_i32, %c0_i32_0 : i32, i32
  }
  func.func @transform_13(%arg0: i32) -> (i32, i32, i32) {
    %c0_i32 = arith.constant 0 : i32
    %c0_i32_0 = arith.constant 0 : i32
    %c0_i32_1 = arith.constant 0 : i32
    return %arg0, %c0_i32, %c0_i32_0 : i32, i32, i32
  }
}

</mosaic_0001>

<llo_original>
// kernel: tpu_custom_call.1
$region0: #{tpu_custom_call.1}
  #allocation0 [shape = 'u32[]', space=smem, size = 0x4, offset = 0x4, fixed_abs, tag = 'smem constant byte address 0x4 - core index']
  #allocation1 [shape = 'u32[72,128]{1,0:T(1,128)}', space=vmem, size = 0x9000, scoped, tag = 'internal scratch']
  %s0 = inlined_call_operand.vmem [shape: f32[2,16,64], index: 0, kind: input, shape index: {}]
  %s1 = inlined_call_operand.vmem [shape: f32[3,8,16], index: 1, kind: input, shape index: {}]
  %s2 = inlined_call_operand.vmem [shape: f32[3,64,64], index: 2, kind: input, shape index: {}]
  %s3 = inlined_call_operand.vmem [shape: f32[1,64], index: 3, kind: input, shape index: {}]
  %s4 = inlined_call_operand.vmem [shape: f32[1,64], index: 4, kind: input, shape index: {}]
  %s5 = inlined_call_operand.vmem [shape: f32[3,4,8], index: 5, kind: input, shape index: {}]
  %s6 = inlined_call_operand.vmem [shape: f32[3,64,32], index: 6, kind: input, shape index: {}]
  %s7 = inlined_call_operand.vmem [shape: f32[1,32], index: 7, kind: input, shape index: {}]
  %s8 = inlined_call_operand.vmem [shape: f32[1,32], index: 8, kind: input, shape index: {}]
  %s9 = inlined_call_operand.vmem [shape: f32[3,2,4], index: 9, kind: input, shape index: {}]
  %s10 = inlined_call_operand.vmem [shape: f32[3,32,16], index: 10, kind: input, shape index: {}]
  %s11 = inlined_call_operand.vmem [shape: f32[1,16], index: 11, kind: input, shape index: {}]
  %s12 = inlined_call_operand.vmem [shape: f32[1,16], index: 12, kind: input, shape index: {}]
  %s13 = inlined_call_operand.hbm [shape: f32[2,2,16], index: 13, kind: output, shape index: {}]
  %s14 = sld [smem:[#allocation0]]
  $region85: #{tpu_custom_call.1} parent=0
    _
  %s16 = ssub.s32 1, %s14
  %s17 = scalar_select 0, %s16, %s14
  $region1: #{tpu_custom_call.1} parent=0
    #allocation2 [shape = 'u8[2048]{0}', space=vmem, size = 0x800, scoped, tag = 'output window, operand 0']
    #allocation3 [shape = 's32[2]{0}', space=sflag, size = 0x8, scoped, tag = 'scoped memory for tpu_custom_call.1']
    %18 = vsyncpa [#allocation3], 0
    %s19 = scalar_lea.sflag [#allocation3], 1
    %20 = vsyncpa %s19, 0
    loop: start=0, step=1, limit=4
    $region2: #{tpu_custom_call.1} parent=1 // loop_pre_header
      _
    $region3: #{tpu_custom_call.1} parent=1 // loop_header
      %s22 = sphi 0, %s26
      %p23 = scmp.ge.s32.totalorder %s22, 4
      %s32 = sphi 0, %s34
      %s35 = sphi 0, %s32
      %s36 = sphi 0, %s35
      %s52 = sphi 0, %s36
      %s56 = sphi 0, %s56
      %s58 = sphi 0, %s56
      %s59 = sphi 0, %s58
      %s73 = sphi 0, %s59
      %s77 = sphi 0, %s77
      %s79 = sphi 0, %s77
      %s80 = sphi 0, %s79
      %s94 = sphi 0, %s80
      %s98 = sphi 0, %s98
      %s100 = sphi 0, %s98
      %s101 = sphi 0, %s100
      %s115 = sphi 0, %s101
      %s119 = sphi 0, %s119
      %s121 = sphi 0, %s119
      %s122 = sphi 0, %s121
      %s136 = sphi 0, %s122
      %s140 = sphi 0, %s140
      %s142 = sphi 0, %s140
      %s143 = sphi 0, %s142
      %s157 = sphi 0, %s143
      %s161 = sphi 0, %s161
      %s163 = sphi 0, %s161
      %s164 = sphi 0, %s163
      %s178 = sphi 0, %s164
      %s182 = sphi 0, %s182
      %s184 = sphi 0, %s182
      %s185 = sphi 0, %s184
      %s199 = sphi 0, %s185
      %s203 = sphi 0, %s203
      %s205 = sphi 0, %s203
      %s206 = sphi 0, %s205
      %s220 = sphi 0, %s206
      %s224 = sphi 0, %s224
      %s226 = sphi 0, %s224
      %s227 = sphi 0, %s226
      %s241 = sphi 0, %s227
      %s245 = sphi 0, %s245
      %s247 = sphi 0, %s245
      %s248 = sphi 0, %s247
      %s262 = sphi 0, %s248
      %s266 = sphi 0, %s266
      %s268 = sphi 0, %s266
      %s269 = sphi 0, %s268
      %s283 = sphi 0, %s269
      %s287 = sphi 0, %s287
      %s289 = sphi 0, %s287
      %s290 = sphi 0, %s289
      %s304 = sphi 0, %s290
      %s310 = sphi 0, %s312
      %s313 = sphi 0, %s310
      %s314 = sphi 0, %s313
      %s330 = sphi 0, %s314
    $region4: #{tpu_custom_call.1} parent=1 // loop_header_branch
      %25 = sbr.rel (%p23) target = $region8
    $region5: #{tpu_custom_call.1} parent=1 // loop_body
      %s27 = ssub.s32 %s22, 1
      %s28 = ssub.s32 %s22, 2
      %s29 = sadd.s32 %s22, 1
      %s30 = ssub.s32 %s22, %s29
      %p31 = scmp.eq.s32.totalorder %s30, 0
      %s33 = sadd.s32 %s32, 1
      %s34 = scalar_select %p31, %s32, %s33
      %p37 = pneg %p31
      %p38 = scmp.eq.s32.totalorder %s22, 1
      %p39 = por %p37, %p38
      %p40 = scmp.ne.s32.totalorder %s32, %s35
      %p41 = scmp.eq.s32.totalorder %s22, 0
      %p42 = por %p40, %p41
      %p43 = scmp.ne.s32.totalorder %s32, %s35
      %p44 = scmp.eq.s32.totalorder %s27, 1
      %p45 = por %p43, %p44
      %p46 = scmp.ne.s32.totalorder %s35, %s36
      %p47 = scmp.eq.s32.totalorder %s27, 0
      %p48 = por %p46, %p47
      %p49 = scmp.ne.s32.totalorder %s35, %s36
      %p50 = scmp.eq.s32.totalorder %s28, 1
      %p51 = por %p49, %p50
      %p53 = scmp.ne.s32.totalorder %s36, %s52
      %p54 = scmp.eq.s32.totalorder %s28, 0
      %p55 = por %p53, %p54
      %s57 = sadd.s32 %s56, 1
      %p60 = scmp.eq.s32.totalorder %s22, 1
      %p61 = scmp.ne.s32.totalorder %s56, %s58
      %p62 = scmp.eq.s32.totalorder %s22, 0
      %p63 = por %p61, %p62
      %p64 = scmp.ne.s32.totalorder %s56, %s58
      %p65 = scmp.eq.s32.totalorder %s27, 1
      %p66 = por %p64, %p65
      %p67 = scmp.ne.s32.totalorder %s58, %s59
      %p68 = scmp.eq.s32.totalorder %s27, 0
      %p69 = por %p67, %p68
      %p70 = scmp.ne.s32.totalorder %s58, %s59
      %p71 = scmp.eq.s32.totalorder %s28, 1
      %p72 = por %p70, %p71
      %p74 = scmp.ne.s32.totalorder %s59, %s73
      %p75 = scmp.eq.s32.totalorder %s28, 0
      %p76 = por %p74, %p75
      %s78 = sadd.s32 %s77, 1
      %p81 = scmp.eq.s32.totalorder %s22, 1
      %p82 = scmp.ne.s32.totalorder %s77, %s79
      %p83 = scmp.eq.s32.totalorder %s22, 0
      %p84 = por %p82, %p83
      %p85 = scmp.ne.s32.totalorder %s77, %s79
      %p86 = scmp.eq.s32.totalorder %s27, 1
      %p87 = por %p85, %p86
      %p88 = scmp.ne.s32.totalorder %s79, %s80
      %p89 = scmp.eq.s32.totalorder %s27, 0
      %p90 = por %p88, %p89
      %p91 = scmp.ne.s32.totalorder %s79, %s80
      %p92 = scmp.eq.s32.totalorder %s28, 1
      %p93 = por %p91, %p92
      %p95 = scmp.ne.s32.totalorder %s80, %s94
      %p96 = scmp.eq.s32.totalorder %s28, 0
      %p97 = por %p95, %p96
      %s99 = sadd.s32 %s98, 1
      %p102 = scmp.eq.s32.totalorder %s22, 1
      %p103 = scmp.ne.s32.totalorder %s98, %s100
      %p104 = scmp.eq.s32.totalorder %s22, 0
      %p105 = por %p103, %p104
      %p106 = scmp.ne.s32.totalorder %s98, %s100
      %p107 = scmp.eq.s32.totalorder %s27, 1
      %p108 = por %p106, %p107
      %p109 = scmp.ne.s32.totalorder %s100, %s101
      %p110 = scmp.eq.s32.totalorder %s27, 0
      %p111 = por %p109, %p110
      %p112 = scmp.ne.s32.totalorder %s100, %s101
      %p113 = scmp.eq.s32.totalorder %s28, 1
      %p114 = por %p112, %p113
      %p116 = scmp.ne.s32.totalorder %s101, %s115
      %p117 = scmp.eq.s32.totalorder %s28, 0
      %p118 = por %p116, %p117
      %s120 = sadd.s32 %s119, 1
      %p123 = scmp.eq.s32.totalorder %s22, 1
      %p124 = scmp.ne.s32.totalorder %s119, %s121
      %p125 = scmp.eq.s32.totalorder %s22, 0
      %p126 = por %p124, %p125
      %p127 = scmp.ne.s32.totalorder %s119, %s121
      %p128 = scmp.eq.s32.totalorder %s27, 1
      %p129 = por %p127, %p128
      %p130 = scmp.ne.s32.totalorder %s121, %s122
      %p131 = scmp.eq.s32.totalorder %s27, 0
      %p132 = por %p130, %p131
      %p133 = scmp.ne.s32.totalorder %s121, %s122
      %p134 = scmp.eq.s32.totalorder %s28, 1
      %p135 = por %p133, %p134
      %p137 = scmp.ne.s32.totalorder %s122, %s136
      %p138 = scmp.eq.s32.totalorder %s28, 0
      %p139 = por %p137, %p138
      %s141 = sadd.s32 %s140, 1
      %p144 = scmp.eq.s32.totalorder %s22, 1
      %p145 = scmp.ne.s32.totalorder %s140, %s142
      %p146 = scmp.eq.s32.totalorder %s22, 0
      %p147 = por %p145, %p146
      %p148 = scmp.ne.s32.totalorder %s140, %s142
      %p149 = scmp.eq.s32.totalorder %s27, 1
      %p150 = por %p148, %p149
      %p151 = scmp.ne.s32.totalorder %s142, %s143
      %p152 = scmp.eq.s32.totalorder %s27, 0
      %p153 = por %p151, %p152
      %p154 = scmp.ne.s32.totalorder %s142, %s143
      %p155 = scmp.eq.s32.totalorder %s28, 1
      %p156 = por %p154, %p155
      %p158 = scmp.ne.s32.totalorder %s143, %s157
      %p159 = scmp.eq.s32.totalorder %s28, 0
      %p160 = por %p158, %p159
      %s162 = sadd.s32 %s161, 1
      %p165 = scmp.eq.s32.totalorder %s22, 1
      %p166 = scmp.ne.s32.totalorder %s161, %s163
      %p167 = scmp.eq.s32.totalorder %s22, 0
      %p168 = por %p166, %p167
      %p169 = scmp.ne.s32.totalorder %s161, %s163
      %p170 = scmp.eq.s32.totalorder %s27, 1
      %p171 = por %p169, %p170
      %p172 = scmp.ne.s32.totalorder %s163, %s164
      %p173 = scmp.eq.s32.totalorder %s27, 0
      %p174 = por %p172, %p173
      %p175 = scmp.ne.s32.totalorder %s163, %s164
      %p176 = scmp.eq.s32.totalorder %s28, 1
      %p177 = por %p175, %p176
      %p179 = scmp.ne.s32.totalorder %s164, %s178
      %p180 = scmp.eq.s32.totalorder %s28, 0
      %p181 = por %p179, %p180
      %s183 = sadd.s32 %s182, 1
      %p186 = scmp.eq.s32.totalorder %s22, 1
      %p187 = scmp.ne.s32.totalorder %s182, %s184
      %p188 = scmp.eq.s32.totalorder %s22, 0
      %p189 = por %p187, %p188
      %p190 = scmp.ne.s32.totalorder %s182, %s184
      %p191 = scmp.eq.s32.totalorder %s27, 1
      %p192 = por %p190, %p191
      %p193 = scmp.ne.s32.totalorder %s184, %s185
      %p194 = scmp.eq.s32.totalorder %s27, 0
      %p195 = por %p193, %p194
      %p196 = scmp.ne.s32.totalorder %s184, %s185
      %p197 = scmp.eq.s32.totalorder %s28, 1
      %p198 = por %p196, %p197
      %p200 = scmp.ne.s32.totalorder %s185, %s199
      %p201 = scmp.eq.s32.totalorder %s28, 0
      %p202 = por %p200, %p201
      %s204 = sadd.s32 %s203, 1
      %p207 = scmp.eq.s32.totalorder %s22, 1
      %p208 = scmp.ne.s32.totalorder %s203, %s205
      %p209 = scmp.eq.s32.totalorder %s22, 0
      %p210 = por %p208, %p209
      %p211 = scmp.ne.s32.totalorder %s203, %s205
      %p212 = scmp.eq.s32.totalorder %s27, 1
      %p213 = por %p211, %p212
      %p214 = scmp.ne.s32.totalorder %s205, %s206
      %p215 = scmp.eq.s32.totalorder %s27, 0
      %p216 = por %p214, %p215
      %p217 = scmp.ne.s32.totalorder %s205, %s206
      %p218 = scmp.eq.s32.totalorder %s28, 1
      %p219 = por %p217, %p218
      %p221 = scmp.ne.s32.totalorder %s206, %s220
      %p222 = scmp.eq.s32.totalorder %s28, 0
      %p223 = por %p221, %p222
      %s225 = sadd.s32 %s224, 1
      %p228 = scmp.eq.s32.totalorder %s22, 1
      %p229 = scmp.ne.s32.totalorder %s224, %s226
      %p230 = scmp.eq.s32.totalorder %s22, 0
      %p231 = por %p229, %p230
      %p232 = scmp.ne.s32.totalorder %s224, %s226
      %p233 = scmp.eq.s32.totalorder %s27, 1
      %p234 = por %p232, %p233
      %p235 = scmp.ne.s32.totalorder %s226, %s227
      %p236 = scmp.eq.s32.totalorder %s27, 0
      %p237 = por %p235, %p236
      %p238 = scmp.ne.s32.totalorder %s226, %s227
      %p239 = scmp.eq.s32.totalorder %s28, 1
      %p240 = por %p238, %p239
      %p242 = scmp.ne.s32.totalorder %s227, %s241
      %p243 = scmp.eq.s32.totalorder %s28, 0
      %p244 = por %p242, %p243
      %s246 = sadd.s32 %s245, 1
      %p249 = scmp.eq.s32.totalorder %s22, 1
      %p250 = scmp.ne.s32.totalorder %s245, %s247
      %p251 = scmp.eq.s32.totalorder %s22, 0
      %p252 = por %p250, %p251
      %p253 = scmp.ne.s32.totalorder %s245, %s247
      %p254 = scmp.eq.s32.totalorder %s27, 1
      %p255 = por %p253, %p254
      %p256 = scmp.ne.s32.totalorder %s247, %s248
      %p257 = scmp.eq.s32.totalorder %s27, 0
      %p258 = por %p256, %p257
      %p259 = scmp.ne.s32.totalorder %s247, %s248
      %p260 = scmp.eq.s32.totalorder %s28, 1
      %p261 = por %p259, %p260
      %p263 = scmp.ne.s32.totalorder %s248, %s262
      %p264 = scmp.eq.s32.totalorder %s28, 0
      %p265 = por %p263, %p264
      %s267 = sadd.s32 %s266, 1
      %p270 = scmp.eq.s32.totalorder %s22, 1
      %p271 = scmp.ne.s32.totalorder %s266, %s268
      %p272 = scmp.eq.s32.totalorder %s22, 0
      %p273 = por %p271, %p272
      %p274 = scmp.ne.s32.totalorder %s266, %s268
      %p275 = scmp.eq.s32.totalorder %s27, 1
      %p276 = por %p274, %p275
      %p277 = scmp.ne.s32.totalorder %s268, %s269
      %p278 = scmp.eq.s32.totalorder %s27, 0
      %p279 = por %p277, %p278
      %p280 = scmp.ne.s32.totalorder %s268, %s269
      %p281 = scmp.eq.s32.totalorder %s28, 1
      %p282 = por %p280, %p281
      %p284 = scmp.ne.s32.totalorder %s269, %s283
      %p285 = scmp.eq.s32.totalorder %s28, 0
      %p286 = por %p284, %p285
      %s288 = sadd.s32 %s287, 1
      %p291 = scmp.eq.s32.totalorder %s22, 1
      %p292 = scmp.ne.s32.totalorder %s287, %s289
      %p293 = scmp.eq.s32.totalorder %s22, 0
      %p294 = por %p292, %p293
      %p295 = scmp.ne.s32.totalorder %s287, %s289
      %p296 = scmp.eq.s32.totalorder %s27, 1
      %p297 = por %p295, %p296
      %p298 = scmp.ne.s32.totalorder %s289, %s290
      %p299 = scmp.eq.s32.totalorder %s27, 0
      %p300 = por %p298, %p299
      %p301 = scmp.ne.s32.totalorder %s289, %s290
      %p302 = scmp.eq.s32.totalorder %s28, 1
      %p303 = por %p301, %p302
      %p305 = scmp.ne.s32.totalorder %s290, %s304
      %p306 = scmp.eq.s32.totalorder %s28, 0
      %p307 = por %p305, %p306
      %s308 = ssub.s32 %s22, %s29
      %p309 = scmp.eq.s32.totalorder %s308, 0
      %s311 = sadd.s32 %s310, 1
      %s312 = scalar_select %p309, %s310, %s311
      %p315 = pneg %p309
      %p316 = scmp.eq.s32.totalorder %s22, 1
      %p317 = por %p315, %p316
      %p318 = scmp.ne.s32.totalorder %s310, %s313
      %p319 = scmp.eq.s32.totalorder %s22, 0
      %p320 = por %p318, %p319
      %p321 = scmp.ne.s32.totalorder %s310, %s313
      %p322 = scmp.eq.s32.totalorder %s27, 1
      %p323 = por %p321, %p322
      %p324 = scmp.ne.s32.totalorder %s313, %s314
      %p325 = scmp.eq.s32.totalorder %s27, 0
      %p326 = por %p324, %p325
      %p327 = scmp.ne.s32.totalorder %s313, %s314
      %p328 = scmp.eq.s32.totalorder %s28, 1
      %p329 = por %p327, %p328
      %p331 = scmp.ne.s32.totalorder %s314, %s330
      %p332 = scmp.eq.s32.totalorder %s28, 0
      %p333 = por %p331, %p332
      %p334 = scmp.le.s32.totalorder 1, %s22
      %p335 = scmp.lt.s32.totalorder %s22, 3
      %p336 = pnand %p334, %p335
      %p337 = pneg %p336
      // Predicated region
      $region9: #{tpu_custom_call.1} parent=5 // pred_check
        _
      $region10: #{tpu_custom_call.1} parent=5 // pred_check_branch
        %339 = sbr.rel (%p336) target = $region12
      $region11: #{tpu_custom_call.1} parent=5 // pred_region
        %s340 = ssub.s32 %s22, 1
        // Predicated region
        $region13: #{tpu_custom_call.1} parent=11 // pred_check
          %p341 = pneg %p69
        $region14: #{tpu_custom_call.1} parent=11 // pred_check_branch
          %343 = sbr.rel (%p341) target = $region16
        $region15: #{tpu_custom_call.1} parent=11 // pred_region
          _
        $region16: #{tpu_custom_call.1} parent=11 // pred_fallthru
          _
        // Predicated region
        $region17: #{tpu_custom_call.1} parent=11 // pred_check
          %p344 = pneg %p90
        $region18: #{tpu_custom_call.1} parent=11 // pred_check_branch
          %346 = sbr.rel (%p344) target = $region20
        $region19: #{tpu_custom_call.1} parent=11 // pred_region
          _
        $region20: #{tpu_custom_call.1} parent=11 // pred_fallthru
          _
        // Predicated region
        $region21: #{tpu_custom_call.1} parent=11 // pred_check
          %p347 = pneg %p111
        $region22: #{tpu_custom_call.1} parent=11 // pred_check_branch
          %349 = sbr.rel (%p347) target = $region24
        $region23: #{tpu_custom_call.1} parent=11 // pred_region
          _
        $region24: #{tpu_custom_call.1} parent=11 // pred_fallthru
          _
        // Predicated region
        $region25: #{tpu_custom_call.1} parent=11 // pred_check
          %p350 = pneg %p132
        $region26: #{tpu_custom_call.1} parent=11 // pred_check_branch
          %352 = sbr.rel (%p350) target = $region28
        $region27: #{tpu_custom_call.1} parent=11 // pred_region
          _
        $region28: #{tpu_custom_call.1} parent=11 // pred_fallthru
          _
        // Predicated region
        $region29: #{tpu_custom_call.1} parent=11 // pred_check
          %p353 = pneg %p153
        $region30: #{tpu_custom_call.1} parent=11 // pred_check_branch
          %355 = sbr.rel (%p353) target = $region32
        $region31: #{tpu_custom_call.1} parent=11 // pred_region
          _
        $region32: #{tpu_custom_call.1} parent=11 // pred_fallthru
          _
        // Predicated region
        $region33: #{tpu_custom_call.1} parent=11 // pred_check
          %p356 = pneg %p174
        $region34: #{tpu_custom_call.1} parent=11 // pred_check_branch
          %358 = sbr.rel (%p356) target = $region36
        $region35: #{tpu_custom_call.1} parent=11 // pred_region
          _
        $region36: #{tpu_custom_call.1} parent=11 // pred_fallthru
          _
        // Predicated region
        $region37: #{tpu_custom_call.1} parent=11 // pred_check
          %p359 = pneg %p195
        $region38: #{tpu_custom_call.1} parent=11 // pred_check_branch
          %361 = sbr.rel (%p359) target = $region40
        $region39: #{tpu_custom_call.1} parent=11 // pred_region
          _
        $region40: #{tpu_custom_call.1} parent=11 // pred_fallthru
          _
        // Predicated region
        $region41: #{tpu_custom_call.1} parent=11 // pred_check
          %p362 = pneg %p216
        $region42: #{tpu_custom_call.1} parent=11 // pred_check_branch
          %364 = sbr.rel (%p362) target = $region44
        $region43: #{tpu_custom_call.1} parent=11 // pred_region
          _
        $region44: #{tpu_custom_call.1} parent=11 // pred_fallthru
          _
        // Predicated region
        $region45: #{tpu_custom_call.1} parent=11 // pred_check
          %p365 = pneg %p237
        $region46: #{tpu_custom_call.1} parent=11 // pred_check_branch
          %367 = sbr.rel (%p365) target = $region48
        $region47: #{tpu_custom_call.1} parent=11 // pred_region
          _
        $region48: #{tpu_custom_call.1} parent=11 // pred_fallthru
          _
        // Predicated region
        $region49: #{tpu_custom_call.1} parent=11 // pred_check
          %p368 = pneg %p258
        $region50: #{tpu_custom_call.1} parent=11 // pred_check_branch
          %370 = sbr.rel (%p368) target = $region52
        $region51: #{tpu_custom_call.1} parent=11 // pred_region
          _
        $region52: #{tpu_custom_call.1} parent=11 // pred_fallthru
          _
        // Predicated region
        $region53: #{tpu_custom_call.1} parent=11 // pred_check
          %p371 = pneg %p279
        $region54: #{tpu_custom_call.1} parent=11 // pred_check_branch
          %373 = sbr.rel (%p371) target = $region56
        $region55: #{tpu_custom_call.1} parent=11 // pred_region
          _
        $region56: #{tpu_custom_call.1} parent=11 // pred_fallthru
          _
        // Predicated region
        $region57: #{tpu_custom_call.1} parent=11 // pred_check
          %p374 = pneg %p300
        $region58: #{tpu_custom_call.1} parent=11 // pred_check_branch
          %376 = sbr.rel (%p374) target = $region60
        $region59: #{tpu_custom_call.1} parent=11 // pred_region
          _
        $region60: #{tpu_custom_call.1} parent=11 // pred_fallthru
          _
      $region12: #{tpu_custom_call.1} parent=5 // pred_fallthru
        _
      %p377 = scmp.lt.s32.totalorder %s22, 2
      // Predicated region
      $region61: #{tpu_custom_call.1} parent=5 // pred_check
        %p378 = pneg %p377
      $region62: #{tpu_custom_call.1} parent=5 // pred_check_branch
        %380 = sbr.rel (%p378) target = $region64
      $region63: #{tpu_custom_call.1} parent=5 // pred_region
        // Predicated region
        $region65: #{tpu_custom_call.1} parent=63 // pred_check
          %p381 = pneg %p42
        $region66: #{tpu_custom_call.1} parent=63 // pred_check_branch
          %383 = sbr.rel (%p381) target = $region68
        $region67: #{tpu_custom_call.1} parent=63 // pred_region
          %p384 = scmp.lt.s32.totalorder %s22, 1
          %s385 = scalar_select %p384, %s22, 1
          %s386 = smul.addr %s385, 2
          %s387 = smul.addr %s386, 8
          %s388 = scalar_lea.vmem %s0, %s387
        $region68: #{tpu_custom_call.1} parent=63 // pred_fallthru
          _
      $region64: #{tpu_custom_call.1} parent=5 // pred_fallthru
        _
      %p389 = scmp.le.s32.totalorder 1, %s22
      %p390 = scmp.lt.s32.totalorder %s22, 3
      %p391 = pnand %p389, %p390
      %p392 = pneg %p391
      // Predicated region
      $region69: #{tpu_custom_call.1} parent=5 // pred_check
        _
      $region70: #{tpu_custom_call.1} parent=5 // pred_check_branch
        %394 = sbr.rel (%p391) target = $region72
      $region71: #{tpu_custom_call.1} parent=5 // pred_region
        %s395 = ssub.s32 %s22, 1
        %p396 = scmp.lt.s32.totalorder %s27, 1
        %s397 = scalar_select %p396, %s27, 1
        %s398 = smul.addr %s397, 2
        %s399 = smul.addr %s398, 8
        %s400 = scalar_lea.vmem %s0, %s399
        %p401 = pneg %p48
        %p402 = pneg %p45
        %p403 = pneg %p69
        %p404 = pneg %p66
        %p405 = pneg %p90
        %p406 = pneg %p87
        %p407 = pneg %p111
        %p408 = pneg %p108
        %p409 = pneg %p132
        %p410 = pneg %p129
        %p411 = pneg %p153
        %p412 = pneg %p150
        %p413 = pneg %p174
        %p414 = pneg %p171
        %p415 = pneg %p195
        %p416 = pneg %p192
        %p417 = pneg %p216
        %p418 = pneg %p213
        %p419 = pneg %p237
        %p420 = pneg %p234
        %p421 = pneg %p258
        %p422 = pneg %p255
        %p423 = pneg %p279
        %p424 = pneg %p276
        %p425 = pneg %p300
        %p426 = pneg %p297
        %p427 = pneg %p326
        %p428 = pneg %p323
        %s429 = sand.u32 %s313, 1
        %s430 = scalar_lea.sflag [#allocation3], %s429
        %s431 = sand.u32 %s313, 1
        %s432 = smul.addr %s431, 2
        %s433 = scalar_lea.vmem [#allocation2], %s432
        %p434 = scmp.lt.s32.totalorder %s27, 1
        %s435 = scalar_select %p434, %s27, 1
        %s436 = smul.addr %s435, 2
        %s437 = smul.addr %s436, 8
        %s438 = scalar_lea.vmem %s0, %s437
        %v439 = vld [vmem:[%s438] sm:$0xff]
        %v440 = vld [vmem:[%s438 + $0x8] sm:$0xff]
        %v441 = vld [vmem:[%s1] sm:$0xff]
        %vm442 = vcmask 130048
        %v444 = vsel %vm442, %v441, 0
        %446 = vmatpush.msra.mxu0 0.0
        %447 = vmatpush.msra.mxu0 0.0
        %448 = vmatpush.msra.mxu0 0.0
        %449 = vmatpush.msra.mxu0 0.0
        %450 = vmatpush.msra.mxu0 0.0
        %451 = vmatpush.msra.mxu0 0.0
        %452 = vmatpush.msra.mxu0 0.0
        %453 = vmatpush.msra.mxu0 0.0
        %454 = vmatpush.msra.mxu0 0.0
        %455 = vmatpush.msra.mxu0 0.0
        %456 = vmatpush.msra.mxu0 0.0
        %457 = vmatpush.msra.mxu0 0.0
        %458 = vmatpush.msra.mxu0 0.0
        %459 = vmatpush.msra.mxu0 0.0
        %460 = vmatpush.msra.mxu0 %v440
        %461 = vmatpush.msra.mxu0 %v439
        %462 = vmatmul.f32.gmra.mxu0 %v444
        %v463 = vpop.f32.mrf.mxu0
        %v464 = vadd.f32 0.0, %v463
        %465 = vdwg.mxu0
        %v466 = vld [vmem:[%s2] sm:$0xff]
        %v467 = vld [vmem:[%s2 + $0x8] sm:$0xff]
        %v468 = vld [vmem:[%s2 + $0x10] sm:$0xff]
        %v469 = vld [vmem:[%s2 + $0x18] sm:$0xff]
        %v470 = vld [vmem:[%s2 + $0x20] sm:$0xff]
        %v471 = vld [vmem:[%s2 + $0x28] sm:$0xff]
        %v472 = vld [vmem:[%s2 + $0x30] sm:$0xff]
        %v473 = vld [vmem:[%s2 + $0x38] sm:$0xff]
        %s474 = scalar_lea.vmem %s1, 8
        %v475 = vld [vmem:[%s474] sm:$0xff]
        %v477 = vsel %vm442, %v475, 0
        %479 = vmatpush.msra.mxu0 0.0
        %480 = vmatpush.msra.mxu0 0.0
        %481 = vmatpush.msra.mxu0 0.0
        %482 = vmatpush.msra.mxu0 0.0
        %483 = vmatpush.msra.mxu0 0.0
        %484 = vmatpush.msra.mxu0 0.0
        %485 = vmatpush.msra.mxu0 0.0
        %486 = vmatpush.msra.mxu0 0.0
        %487 = vmatpush.msra.mxu0 0.0
        %488 = vmatpush.msra.mxu0 0.0
        %489 = vmatpush.msra.mxu0 0.0
        %490 = vmatpush.msra.mxu0 0.0
        %491 = vmatpush.msra.mxu0 0.0
        %492 = vmatpush.msra.mxu0 0.0
        %493 = vmatpush.msra.mxu0 %v440
        %494 = vmatpush.msra.mxu0 %v439
        %495 = vmatmul.f32.gmra.mxu0 %v477
        %v496 = vpop.f32.mrf.mxu0
        %v497 = vadd.f32 0.0, %v496
        %498 = vdwg.mxu0
        %s499 = scalar_lea.vmem %s2, 64
        %v500 = vld [vmem:[%s499] sm:$0xff]
        %v501 = vld [vmem:[%s499 + $0x8] sm:$0xff]
        %v502 = vld [vmem:[%s499 + $0x10] sm:$0xff]
        %v503 = vld [vmem:[%s499 + $0x18] sm:$0xff]
        %v504 = vld [vmem:[%s499 + $0x20] sm:$0xff]
        %v505 = vld [vmem:[%s499 + $0x28] sm:$0xff]
        %v506 = vld [vmem:[%s499 + $0x30] sm:$0xff]
        %v507 = vld [vmem:[%s499 + $0x38] sm:$0xff]
        %vm508 = vcmask 523264
        %v510 = vsel %vm508, %v497, 0
        %512 = vmatpush.msra.mxu0 0.0
        %513 = vmatpush.msra.mxu0 0.0
        %514 = vmatpush.msra.mxu0 0.0
        %515 = vmatpush.msra.mxu0 0.0
        %516 = vmatpush.msra.mxu0 0.0
        %517 = vmatpush.msra.mxu0 0.0
        %518 = vmatpush.msra.mxu0 0.0
        %519 = vmatpush.msra.mxu0 0.0
        %520 = vmatpush.msra.mxu0 %v507
        %521 = vmatpush.msra.mxu0 %v506
        %522 = vmatpush.msra.mxu0 %v505
        %523 = vmatpush.msra.mxu0 %v504
        %524 = vmatpush.msra.mxu0 %v503
        %525 = vmatpush.msra.mxu0 %v502
        %526 = vmatpush.msra.mxu0 %v501
        %527 = vmatpush.msra.mxu0 %v500
        %528 = vmatmul.f32.gmra.mxu0 %v510
        %v529 = vpop.f32.mrf.mxu0
        %v530 = vadd.f32 0.0, %v529
        %531 = vdwg.mxu0
        %v533 = vsel %vm508, %v464, 0
        %535 = vmatpush.msra.mxu0 0.0
        %536 = vmatpush.msra.mxu0 0.0
        %537 = vmatpush.msra.mxu0 0.0
        %538 = vmatpush.msra.mxu0 0.0
        %539 = vmatpush.msra.mxu0 0.0
        %540 = vmatpush.msra.mxu0 0.0
        %541 = vmatpush.msra.mxu0 0.0
        %542 = vmatpush.msra.mxu0 0.0
        %543 = vmatpush.msra.mxu0 %v473
        %544 = vmatpush.msra.mxu0 %v472
        %545 = vmatpush.msra.mxu0 %v471
        %546 = vmatpush.msra.mxu0 %v470
        %547 = vmatpush.msra.mxu0 %v469
        %548 = vmatpush.msra.mxu0 %v468
        %549 = vmatpush.msra.mxu0 %v467
        %550 = vmatpush.msra.mxu0 %v466
        %551 = vmatmul.f32.gmra.mxu0 %v533
        %v552 = vpop.f32.mrf.mxu0
        %v553 = vadd.f32 %v530, %v552
        %554 = vdwg.mxu0
        %s555 = scalar_lea.vmem %s1, 16
        %v556 = vld [vmem:[%s555] sm:$0xff]
        %v558 = vsel %vm442, %v556, 0
        %560 = vmatpush.msra.mxu0 0.0
        %561 = vmatpush.msra.mxu0 0.0
        %562 = vmatpush.msra.mxu0 0.0
        %563 = vmatpush.msra.mxu0 0.0
        %564 = vmatpush.msra.mxu0 0.0
        %565 = vmatpush.msra.mxu0 0.0
        %566 = vmatpush.msra.mxu0 0.0
        %567 = vmatpush.msra.mxu0 0.0
        %568 = vmatpush.msra.mxu0 0.0
        %569 = vmatpush.msra.mxu0 0.0
        %570 = vmatpush.msra.mxu0 0.0
        %571 = vmatpush.msra.mxu0 0.0
        %572 = vmatpush.msra.mxu0 0.0
        %573 = vmatpush.msra.mxu0 0.0
        %574 = vmatpush.msra.mxu0 %v440
        %575 = vmatpush.msra.mxu0 %v439
        %576 = vmatmul.f32.gmra.mxu0 %v558
        %v577 = vpop.f32.mrf.mxu0
        %v578 = vadd.f32 0.0, %v577
        %579 = vdwg.mxu0
        %s580 = scalar_lea.vmem %s2, 128
        %v581 = vld [vmem:[%s580] sm:$0xff]
        %v582 = vld [vmem:[%s580 + $0x8] sm:$0xff]
        %v583 = vld [vmem:[%s580 + $0x10] sm:$0xff]
        %v584 = vld [vmem:[%s580 + $0x18] sm:$0xff]
        %v585 = vld [vmem:[%s580 + $0x20] sm:$0xff]
        %v586 = vld [vmem:[%s580 + $0x28] sm:$0xff]
        %v587 = vld [vmem:[%s580 + $0x30] sm:$0xff]
        %v588 = vld [vmem:[%s580 + $0x38] sm:$0xff]
        %v590 = vsel %vm508, %v578, 0
        %592 = vmatpush.msra.mxu0 0.0
        %593 = vmatpush.msra.mxu0 0.0
        %594 = vmatpush.msra.mxu0 0.0
        %595 = vmatpush.msra.mxu0 0.0
        %596 = vmatpush.msra.mxu0 0.0
        %597 = vmatpush.msra.mxu0 0.0
        %598 = vmatpush.msra.mxu0 0.0
        %599 = vmatpush.msra.mxu0 0.0
        %600 = vmatpush.msra.mxu0 %v588
        %601 = vmatpush.msra.mxu0 %v587
        %602 = vmatpush.msra.mxu0 %v586
        %603 = vmatpush.msra.mxu0 %v585
        %604 = vmatpush.msra.mxu0 %v584
        %605 = vmatpush.msra.mxu0 %v583
        %606 = vmatpush.msra.mxu0 %v582
        %607 = vmatpush.msra.mxu0 %v581
        %608 = vmatmul.f32.gmra.mxu0 %v590
        %v609 = vpop.f32.mrf.mxu0
        %v610 = vadd.f32 0.0, %v609
        %611 = vdwg.mxu0
        %v612 = vadd.f32 %v553, %v610
        %v613 = vld [vmem:[%s3] sm:$0x1]
        %v615 = vperm.slane %v613, 0
        %v617 = vmul.f32 %v612, %v615
        %v618 = vld [vmem:[%s4] sm:$0x1]
        %v620 = vperm.slane %v618, 0
        %v622 = vadd.f32 %v617, %v620
        %v623 = vmax.f32 %v622, 0.0
        %v624 = vld [vmem:[%s5] sm:$0xf]
        %vm625 = vcmask 64512
        %v627 = vsel %vm625, %v624, 0
        %629 = vmatpush.msra.mxu0 0.0
        %630 = vmatpush.msra.mxu0 0.0
        %631 = vmatpush.msra.mxu0 0.0
        %632 = vmatpush.msra.mxu0 0.0
        %633 = vmatpush.msra.mxu0 0.0
        %634 = vmatpush.msra.mxu0 0.0
        %635 = vmatpush.msra.mxu0 0.0
        %636 = vmatpush.msra.mxu0 0.0
        %637 = vmatpush.msra.mxu0 0.0
        %638 = vmatpush.msra.mxu0 0.0
        %639 = vmatpush.msra.mxu0 0.0
        %640 = vmatpush.msra.mxu0 0.0
        %641 = vmatpush.msra.mxu0 0.0
        %642 = vmatpush.msra.mxu0 0.0
        %643 = vmatpush.msra.mxu0 0.0
        %644 = vmatpush.msra.mxu0 %v623
        %645 = vmatmul.f32.gmra.mxu0 %v627
        %v646 = vpop.f32.mrf.mxu0
        %v647 = vadd.f32 0.0, %v646
        %648 = vdwg.mxu0
        %v649 = vld [vmem:[%s6] sm:$0xff]
        %v650 = vld [vmem:[%s6 + $0x8] sm:$0xff]
        %v651 = vld [vmem:[%s6 + $0x10] sm:$0xff]
        %v652 = vld [vmem:[%s6 + $0x18] sm:$0xff]
        %v653 = vld [vmem:[%s6 + $0x20] sm:$0xff]
        %v654 = vld [vmem:[%s6 + $0x28] sm:$0xff]
        %v655 = vld [vmem:[%s6 + $0x30] sm:$0xff]
        %v656 = vld [vmem:[%s6 + $0x38] sm:$0xff]
        %s657 = scalar_lea.vmem %s5, 4
        %v658 = vld [vmem:[%s657] sm:$0xf]
        %v660 = vsel %vm625, %v658, 0
        %662 = vmatpush.msra.mxu0 0.0
        %663 = vmatpush.msra.mxu0 0.0
        %664 = vmatpush.msra.mxu0 0.0
        %665 = vmatpush.msra.mxu0 0.0
        %666 = vmatpush.msra.mxu0 0.0
        %667 = vmatpush.msra.mxu0 0.0
        %668 = vmatpush.msra.mxu0 0.0
        %669 = vmatpush.msra.mxu0 0.0
        %670 = vmatpush.msra.mxu0 0.0
        %671 = vmatpush.msra.mxu0 0.0
        %672 = vmatpush.msra.mxu0 0.0
        %673 = vmatpush.msra.mxu0 0.0
        %674 = vmatpush.msra.mxu0 0.0
        %675 = vmatpush.msra.mxu0 0.0
        %676 = vmatpush.msra.mxu0 0.0
        %677 = vmatpush.msra.mxu0 %v623
        %678 = vmatmul.f32.gmra.mxu0 %v660
        %v679 = vpop.f32.mrf.mxu0
        %v680 = vadd.f32 0.0, %v679
        %681 = vdwg.mxu0
        %s682 = scalar_lea.vmem %s6, 64
        %v683 = vld [vmem:[%s682] sm:$0xff]
        %v684 = vld [vmem:[%s682 + $0x8] sm:$0xff]
        %v685 = vld [vmem:[%s682 + $0x10] sm:$0xff]
        %v686 = vld [vmem:[%s682 + $0x18] sm:$0xff]
        %v687 = vld [vmem:[%s682 + $0x20] sm:$0xff]
        %v688 = vld [vmem:[%s682 + $0x28] sm:$0xff]
        %v689 = vld [vmem:[%s682 + $0x30] sm:$0xff]
        %v690 = vld [vmem:[%s682 + $0x38] sm:$0xff]
        %v692 = vsel %vm508, %v680, 0
        %694 = vmatpush.msra.mxu0 0.0
        %695 = vmatpush.msra.mxu0 0.0
        %696 = vmatpush.msra.mxu0 0.0
        %697 = vmatpush.msra.mxu0 0.0
        %698 = vmatpush.msra.mxu0 0.0
        %699 = vmatpush.msra.mxu0 0.0
        %700 = vmatpush.msra.mxu0 0.0
        %701 = vmatpush.msra.mxu0 0.0
        %702 = vmatpush.msra.mxu0 %v690
        %703 = vmatpush.msra.mxu0 %v689
        %704 = vmatpush.msra.mxu0 %v688
        %705 = vmatpush.msra.mxu0 %v687
        %706 = vmatpush.msra.mxu0 %v686
        %707 = vmatpush.msra.mxu0 %v685
        %708 = vmatpush.msra.mxu0 %v684
        %709 = vmatpush.msra.mxu0 %v683
        %710 = vmatmul.f32.gmra.mxu0 %v692
        %v711 = vpop.f32.mrf.mxu0
        %v712 = vadd.f32 0.0, %v711
        %713 = vdwg.mxu0
        %v715 = vsel %vm508, %v647, 0
        %717 = vmatpush.msra.mxu0 0.0
        %718 = vmatpush.msra.mxu0 0.0
        %719 = vmatpush.msra.mxu0 0.0
        %720 = vmatpush.msra.mxu0 0.0
        %721 = vmatpush.msra.mxu0 0.0
        %722 = vmatpush.msra.mxu0 0.0
        %723 = vmatpush.msra.mxu0 0.0
        %724 = vmatpush.msra.mxu0 0.0
        %725 = vmatpush.msra.mxu0 %v656
        %726 = vmatpush.msra.mxu0 %v655
        %727 = vmatpush.msra.mxu0 %v654
        %728 = vmatpush.msra.mxu0 %v653
        %729 = vmatpush.msra.mxu0 %v652
        %730 = vmatpush.msra.mxu0 %v651
        %731 = vmatpush.msra.mxu0 %v650
        %732 = vmatpush.msra.mxu0 %v649
        %733 = vmatmul.f32.gmra.mxu0 %v715
        %v734 = vpop.f32.mrf.mxu0
        %v735 = vadd.f32 %v712, %v734
        %736 = vdwg.mxu0
        %s737 = scalar_lea.vmem %s5, 8
        %v738 = vld [vmem:[%s737] sm:$0xf]
        %v740 = vsel %vm625, %v738, 0
        %742 = vmatpush.msra.mxu0 0.0
        %743 = vmatpush.msra.mxu0 0.0
        %744 = vmatpush.msra.mxu0 0.0
        %745 = vmatpush.msra.mxu0 0.0
        %746 = vmatpush.msra.mxu0 0.0
        %747 = vmatpush.msra.mxu0 0.0
        %748 = vmatpush.msra.mxu0 0.0
        %749 = vmatpush.msra.mxu0 0.0
        %750 = vmatpush.msra.mxu0 0.0
        %751 = vmatpush.msra.mxu0 0.0
        %752 = vmatpush.msra.mxu0 0.0
        %753 = vmatpush.msra.mxu0 0.0
        %754 = vmatpush.msra.mxu0 0.0
        %755 = vmatpush.msra.mxu0 0.0
        %756 = vmatpush.msra.mxu0 0.0
        %757 = vmatpush.msra.mxu0 %v623
        %758 = vmatmul.f32.gmra.mxu0 %v740
        %v759 = vpop.f32.mrf.mxu0
        %v760 = vadd.f32 0.0, %v759
        %761 = vdwg.mxu0
        %s762 = scalar_lea.vmem %s6, 128
        %v763 = vld [vmem:[%s762] sm:$0xff]
        %v764 = vld [vmem:[%s762 + $0x8] sm:$0xff]
        %v765 = vld [vmem:[%s762 + $0x10] sm:$0xff]
        %v766 = vld [vmem:[%s762 + $0x18] sm:$0xff]
        %v767 = vld [vmem:[%s762 + $0x20] sm:$0xff]
        %v768 = vld [vmem:[%s762 + $0x28] sm:$0xff]
        %v769 = vld [vmem:[%s762 + $0x30] sm:$0xff]
        %v770 = vld [vmem:[%s762 + $0x38] sm:$0xff]
        %v772 = vsel %vm508, %v760, 0
        %774 = vmatpush.msra.mxu0 0.0
        %775 = vmatpush.msra.mxu0 0.0
        %776 = vmatpush.msra.mxu0 0.0
        %777 = vmatpush.msra.mxu0 0.0
        %778 = vmatpush.msra.mxu0 0.0
        %779 = vmatpush.msra.mxu0 0.0
        %780 = vmatpush.msra.mxu0 0.0
        %781 = vmatpush.msra.mxu0 0.0
        %782 = vmatpush.msra.mxu0 %v770
        %783 = vmatpush.msra.mxu0 %v769
        %784 = vmatpush.msra.mxu0 %v768
        %785 = vmatpush.msra.mxu0 %v767
        %786 = vmatpush.msra.mxu0 %v766
        %787 = vmatpush.msra.mxu0 %v765
        %788 = vmatpush.msra.mxu0 %v764
        %789 = vmatpush.msra.mxu0 %v763
        %790 = vmatmul.f32.gmra.mxu0 %v772
        %v791 = vpop.f32.mrf.mxu0
        %v792 = vadd.f32 0.0, %v791
        %793 = vdwg.mxu0
        %v794 = vadd.f32 %v735, %v792
        %v795 = vld [vmem:[%s7] sm:$0x1]
        %v797 = vperm.slane %v795, 0
        %v799 = vmul.f32 %v794, %v797
        %v800 = vld [vmem:[%s8] sm:$0x1]
        %v802 = vperm.slane %v800, 0
        %v804 = vadd.f32 %v799, %v802
        %v805 = vmax.f32 %v804, 0.0
        %v806 = vld [vmem:[%s9] sm:$0x3]
        %vm807 = vcmask 31744
        %v809 = vsel %vm807, %v806, 0
        %vm811 = vcmask 1043456
        %v813 = vsel %vm811, %v805, 0
        %815 = vmatpush.msra.mxu0 0.0
        %816 = vmatpush.msra.mxu0 0.0
        %817 = vmatpush.msra.mxu0 0.0
        %818 = vmatpush.msra.mxu0 0.0
        %819 = vmatpush.msra.mxu0 0.0
        %820 = vmatpush.msra.mxu0 0.0
        %821 = vmatpush.msra.mxu0 0.0
        %822 = vmatpush.msra.mxu0 0.0
        %823 = vmatpush.msra.mxu0 0.0
        %824 = vmatpush.msra.mxu0 0.0
        %825 = vmatpush.msra.mxu0 0.0
        %826 = vmatpush.msra.mxu0 0.0
        %827 = vmatpush.msra.mxu0 0.0
        %828 = vmatpush.msra.mxu0 0.0
        %829 = vmatpush.msra.mxu0 0.0
        %830 = vmatpush.msra.mxu0 %v813
        %831 = vmatmul.f32.gmra.mxu0 %v809
        %v832 = vpop.f32.mrf.mxu0
        %v833 = vadd.f32 0.0, %v832
        %834 = vdwg.mxu0
        %v835 = vld [vmem:[%s10] sm:$0xff]
        %v836 = vld [vmem:[%s10 + $0x8] sm:$0xff]
        %v837 = vld [vmem:[%s10 + $0x10] sm:$0xff]
        %v838 = vld [vmem:[%s10 + $0x18] sm:$0xff]
        %s839 = scalar_lea.vmem %s9, 2
        %v840 = vld [vmem:[%s839] sm:$0x3]
        %v842 = vsel %vm807, %v840, 0
        %844 = vmatpush.msra.mxu0 0.0
        %845 = vmatpush.msra.mxu0 0.0
        %846 = vmatpush.msra.mxu0 0.0
        %847 = vmatpush.msra.mxu0 0.0
        %848 = vmatpush.msra.mxu0 0.0
        %849 = vmatpush.msra.mxu0 0.0
        %850 = vmatpush.msra.mxu0 0.0
        %851 = vmatpush.msra.mxu0 0.0
        %852 = vmatpush.msra.mxu0 0.0
        %853 = vmatpush.msra.mxu0 0.0
        %854 = vmatpush.msra.mxu0 0.0
        %855 = vmatpush.msra.mxu0 0.0
        %856 = vmatpush.msra.mxu0 0.0
        %857 = vmatpush.msra.mxu0 0.0
        %858 = vmatpush.msra.mxu0 0.0
        %859 = vmatpush.msra.mxu0 %v813
        %860 = vmatmul.f32.gmra.mxu0 %v842
        %v861 = vpop.f32.mrf.mxu0
        %v862 = vadd.f32 0.0, %v861
        %863 = vdwg.mxu0
        %s864 = scalar_lea.vmem %s10, 32
        %v865 = vld [vmem:[%s864] sm:$0xff]
        %v866 = vld [vmem:[%s864 + $0x8] sm:$0xff]
        %v867 = vld [vmem:[%s864 + $0x10] sm:$0xff]
        %v868 = vld [vmem:[%s864 + $0x18] sm:$0xff]
        %vm869 = vcmask 261120
        %v871 = vsel %vm869, %v862, 0
        %873 = vmatpush.msra.mxu0 0.0
        %874 = vmatpush.msra.mxu0 0.0
        %875 = vmatpush.msra.mxu0 0.0
        %876 = vmatpush.msra.mxu0 0.0
        %877 = vmatpush.msra.mxu0 0.0
        %878 = vmatpush.msra.mxu0 0.0
        %879 = vmatpush.msra.mxu0 0.0
        %880 = vmatpush.msra.mxu0 0.0
        %881 = vmatpush.msra.mxu0 0.0
        %882 = vmatpush.msra.mxu0 0.0
        %883 = vmatpush.msra.mxu0 0.0
        %884 = vmatpush.msra.mxu0 0.0
        %885 = vmatpush.msra.mxu0 %v868
        %886 = vmatpush.msra.mxu0 %v867
        %887 = vmatpush.msra.mxu0 %v866
        %888 = vmatpush.msra.mxu0 %v865
        %889 = vmatmul.f32.gmra.mxu0 %v871
        %v890 = vpop.f32.mrf.mxu0
        %v891 = vadd.f32 0.0, %v890
        %892 = vdwg.mxu0
        %v894 = vsel %vm869, %v833, 0
        %896 = vmatpush.msra.mxu0 0.0
        %897 = vmatpush.msra.mxu0 0.0
        %898 = vmatpush.msra.mxu0 0.0
        %899 = vmatpush.msra.mxu0 0.0
        %900 = vmatpush.msra.mxu0 0.0
        %901 = vmatpush.msra.mxu0 0.0
        %902 = vmatpush.msra.mxu0 0.0
        %903 = vmatpush.msra.mxu0 0.0
        %904 = vmatpush.msra.mxu0 0.0
        %905 = vmatpush.msra.mxu0 0.0
        %906 = vmatpush.msra.mxu0 0.0
        %907 = vmatpush.msra.mxu0 0.0
        %908 = vmatpush.msra.mxu0 %v838
        %909 = vmatpush.msra.mxu0 %v837
        %910 = vmatpush.msra.mxu0 %v836
        %911 = vmatpush.msra.mxu0 %v835
        %912 = vmatmul.f32.gmra.mxu0 %v894
        %v913 = vpop.f32.mrf.mxu0
        %v914 = vadd.f32 %v891, %v913
        %915 = vdwg.mxu0
        %s916 = scalar_lea.vmem %s9, 4
        %v917 = vld [vmem:[%s916] sm:$0x3]
        %v919 = vsel %vm807, %v917, 0
        %921 = vmatpush.msra.mxu0 0.0
        %922 = vmatpush.msra.mxu0 0.0
        %923 = vmatpush.msra.mxu0 0.0
        %924 = vmatpush.msra.mxu0 0.0
        %925 = vmatpush.msra.mxu0 0.0
        %926 = vmatpush.msra.mxu0 0.0
        %927 = vmatpush.msra.mxu0 0.0
        %928 = vmatpush.msra.mxu0 0.0
        %929 = vmatpush.msra.mxu0 0.0
        %930 = vmatpush.msra.mxu0 0.0
        %931 = vmatpush.msra.mxu0 0.0
        %932 = vmatpush.msra.mxu0 0.0
        %933 = vmatpush.msra.mxu0 0.0
        %934 = vmatpush.msra.mxu0 0.0
        %935 = vmatpush.msra.mxu0 0.0
        %936 = vmatpush.msra.mxu0 %v813
        %937 = vmatmul.f32.gmra.mxu0 %v919
        %v938 = vpop.f32.mrf.mxu0
        %v939 = vadd.f32 0.0, %v938
        %940 = vdwg.mxu0
        %s941 = scalar_lea.vmem %s10, 64
        %v942 = vld [vmem:[%s941] sm:$0xff]
        %v943 = vld [vmem:[%s941 + $0x8] sm:$0xff]
        %v944 = vld [vmem:[%s941 + $0x10] sm:$0xff]
        %v945 = vld [vmem:[%s941 + $0x18] sm:$0xff]
        %v947 = vsel %vm869, %v939, 0
        %949 = vmatpush.msra.mxu0 0.0
        %950 = vmatpush.msra.mxu0 0.0
        %951 = vmatpush.msra.mxu0 0.0
        %952 = vmatpush.msra.mxu0 0.0
        %953 = vmatpush.msra.mxu0 0.0
        %954 = vmatpush.msra.mxu0 0.0
        %955 = vmatpush.msra.mxu0 0.0
        %956 = vmatpush.msra.mxu0 0.0
        %957 = vmatpush.msra.mxu0 0.0
        %958 = vmatpush.msra.mxu0 0.0
        %959 = vmatpush.msra.mxu0 0.0
        %960 = vmatpush.msra.mxu0 0.0
        %961 = vmatpush.msra.mxu0 %v945
        %962 = vmatpush.msra.mxu0 %v944
        %963 = vmatpush.msra.mxu0 %v943
        %964 = vmatpush.msra.mxu0 %v942
        %965 = vmatmul.f32.gmra.mxu0 %v947
        %v966 = vpop.f32.mrf.mxu0
        %v967 = vadd.f32 0.0, %v966
        %968 = vdwg.mxu0
        %v969 = vadd.f32 %v914, %v967
        %v970 = vld [vmem:[%s11] sm:$0x1]
        %v972 = vperm.slane %v970, 0
        %v974 = vmul.f32 %v969, %v972
        %v975 = vld [vmem:[%s12] sm:$0x1]
        %v977 = vperm.slane %v975, 0
        %v979 = vadd.f32 %v974, %v977
        %v980 = vmax.f32 %v979, 0.0
        %vm981 = vcmask 123904
        %982 = vst.msk [vmem:[%s433] sm:$0x3] %vm981, %v980
        %s983 = sand.u32 %s313, 1
        %s984 = scalar_lea.sflag [#allocation3], %s983
        %s985 = sand.u32 %s313, 1
        %s986 = smul.addr %s985, 2
        %s987 = scalar_lea.vmem [#allocation2], %s986
        // Predicated region
        $region73: #{tpu_custom_call.1} parent=71 // pred_check
          %p988 = pneg %p323
        $region74: #{tpu_custom_call.1} parent=71 // pred_check_branch
          %990 = sbr.rel (%p988) target = $region76
        $region75: #{tpu_custom_call.1} parent=71 // pred_region
          %992 = vsyncadd %s984, 0
          %s993 = smul.addr %s27, 2
          %s994 = scalar_lea.hbm %s13, %s993
          %s996 = sshll.u32 %s987, 4
          %s997 = int_to_ptr.vmem [resolvable:$true] %s996
          %s998 = sshll.u32 %s994, 4
          %s999 = int_to_ptr.hbm [resolvable:$true] %s998
          %1001 = dma.vmem_to_hbm [thread:$0]  %s997, 32, %s999, %s984
        $region76: #{tpu_custom_call.1} parent=71 // pred_fallthru
          _
      $region72: #{tpu_custom_call.1} parent=5 // pred_fallthru
        _
      %p1002 = scmp.le.s32.totalorder 2, %s22
      // Predicated region
      $region77: #{tpu_custom_call.1} parent=5 // pred_check
        %p1003 = pneg %p1002
      $region78: #{tpu_custom_call.1} parent=5 // pred_check_branch
        %1005 = sbr.rel (%p1003) target = $region80
      $region79: #{tpu_custom_call.1} parent=5 // pred_region
        %s1006 = ssub.s32 %s22, 2
        // Predicated region
        $region81: #{tpu_custom_call.1} parent=79 // pred_check
          %p1007 = pneg %p329
        $region82: #{tpu_custom_call.1} parent=79 // pred_check_branch
          %1009 = sbr.rel (%p1007) target = $region84
        $region83: #{tpu_custom_call.1} parent=79 // pred_region
          %s1010 = sand.u32 %s314, 1
          %s1011 = scalar_lea.sflag [#allocation3], %s1010
          %s1012 = sand.u32 %s314, 1
          %s1013 = smul.addr %s1012, 2
          %s1014 = scalar_lea.vmem [#allocation2], %s1013
          %1016 = dma.done %s1011, 32
        $region84: #{tpu_custom_call.1} parent=79 // pred_fallthru
          _
      $region80: #{tpu_custom_call.1} parent=5 // pred_fallthru
        _
    $region6: #{tpu_custom_call.1} parent=1 // loop_footer
      %s26 = sadd.s32 1, %s22
    $region7: #{tpu_custom_call.1} parent=1 // loop_footer_branch
      %21 = sbr.rel target = $region3
    $region8: #{tpu_custom_call.1} parent=1 // loop_exit
      _
    %1017 = vsyncpa [#allocation3], 1
    %s1018 = scalar_lea.sflag [#allocation3], 1
    %1019 = vsyncpa %s1018, 1

</llo_original>
